<compile_context>
chip_gen: v5e
topology: v5e:2x2
jax: 0.10.0
libtpu: 0.0.40
codegen_flags: <defaults>
</compile_context>

<pallas_src>
import jax
import jax.numpy as jnp
from jax.experimental import pallas as pl
from jax.experimental.pallas import tpu as pltpu


def _conv_matmul_relu_kernel(x_ref, w_ref, b_ref, o_ref):
    """One lane-dense output tile: (C_out, TM) = relu(W @ patches + b).

    x_ref: (K, TM)     patch tile, output-voxel index on the lane axis (streamed)
    w_ref: (C_out, K)  weights (resident across the grid)
    b_ref: (C_out, 1)  bias, float32 (resident)
    o_ref: (C_out, TM) output tile
    """
    acc = jnp.dot(w_ref[...], x_ref[...], preferred_element_type=jnp.float32)
    acc = acc + b_ref[...]                      # broadcast bias over lanes
    o_ref[...] = jnp.maximum(acc, 0.0).astype(o_ref.dtype)


def _round_up(v, m):
    return ((v + m - 1) // m) * m


def downsampling_conv_block(x, weight, bias, stride=2, *, tm=8192,
                            compute_dtype=jnp.float32, out_dtype=None):
    """Conv3d(k=s=stride, p=0) + ReLU via a lane-dense Pallas matmul kernel.

    x:      (N, C_in, D, H, W)
    weight: (C_out, C_in, s, s, s)
    bias:   (C_out,)
    tm:            target lane-tile width (multiple of 128; sweep 4096-16384)
    compute_dtype: dtype the patches/weights are streamed in (float32 = exact
                   module numerics; bfloat16 = half the input HBM traffic,
                   still f32 MXU accumulate)
    out_dtype:     output dtype (default x.dtype; bfloat16 halves the write
                   stream)
    returns (N, C_out, D//s, H//s, W//s) in out_dtype
    """
    N, C_in, D, H, W = x.shape
    C_out = weight.shape[0]
    s = stride
    Do, Ho, Wo = D // s, H // s, W // s
    M_n = Do * Ho * Wo                    # output voxels per batch element
    K = C_in * s * s * s
    out_dtype = x.dtype if out_dtype is None else out_dtype

    # ---- glue: per-batch non-overlapping s^3 patchify -> (N, K, M_n),
    #      K-order = (C_in, sd, sh, sw) matching weight.reshape(C_out, K)
    # TODO(synk): if xprof shows this rank-8 transpose materialized in HBM
    # despite allow_input_fusion, move the rearrangement in-kernel by streaming
    # NCDHW depth-slabs of x directly (BlockSpec over the original layout).
    xp = x.reshape(N, C_in, Do, s, Ho, s, Wo, s)
    xp = xp.transpose(0, 1, 3, 5, 7, 2, 4, 6)     # (N, C_in, sd, sh, sw, Do, Ho, Wo)
    patches = xp.reshape(N, K, M_n).astype(compute_dtype)

    w_mat = weight.reshape(C_out, K).astype(compute_dtype)
    b_mat = bias.astype(jnp.float32).reshape(C_out, 1)

    cbytes = jnp.dtype(compute_dtype).itemsize
    obytes = jnp.dtype(out_dtype).itemsize

    # ---- lane-dense tile of the voxel axis: multiple of 128, as large as the
    #      knob / problem allow; no padding of the array (ragged last block).
    TM = max(128, (min(int(tm), _round_up(M_n, 128)) // 128) * 128)

    # cap so double-buffered streamed tiles fit comfortably in every
    # generation's scoped-VMEM default (v5e 16 MiB, v6e/v7x 32 MiB)
    per_col_bytes = 2 * K * cbytes + 2 * C_out * obytes
    vmem_tile_budget = 8 * 1024 * 1024
    TM = min(TM, max(128, (vmem_tile_budget // per_col_bytes) // 128 * 128))

    # keep the grid length >= 2 so both v7x TensorCores get work
    if N * pl.cdiv(M_n, TM) < 2 and M_n > 128:
        TM = max(128, _round_up(pl.cdiv(M_n, 2), 128))

    n_tiles = pl.cdiv(M_n, TM)

    vmem_needed = (2 * (K * TM * cbytes + C_out * TM * obytes)
                   + 2 * (C_out * K * cbytes + C_out * 4))
    vmem_limit = int(min(max(2 * vmem_needed, 16 * 1024 * 1024),
                         32 * 1024 * 1024))

    cost = pl.CostEstimate(
        flops=2 * N * M_n * K * C_out,
        transcendentals=0,
        bytes_accessed=(N * K * M_n + C_out * K) * cbytes
        + N * C_out * M_n * obytes + C_out * 4,
    )

    out_flat = pl.pallas_call(
        _conv_matmul_relu_kernel,
        out_shape=jax.ShapeDtypeStruct((N, C_out, M_n), out_dtype),
        grid_spec=pltpu.PrefetchScalarGridSpec(
            num_scalar_prefetch=0,
            grid=(N, n_tiles),
            in_specs=[
                # patches (streamed): batch dim squeezed, voxel tile on lanes
                pl.BlockSpec((pl.Squeezed(), K, TM), lambda n, i: (n, 0, i)),
                # weights / bias: resident across the whole grid
                pl.BlockSpec((C_out, K), lambda n, i: (0, 0)),
                pl.BlockSpec((C_out, 1), lambda n, i: (0, 0)),
            ],
            out_specs=pl.BlockSpec((pl.Squeezed(), C_out, TM),
                                   lambda n, i: (n, 0, i)),
        ),
        compiler_params=pltpu.CompilerParams(
            dimension_semantics=("parallel", "parallel"),
            vmem_limit_bytes=vmem_limit,
            # let XLA fuse the patchify transpose/cast into the kernel's input
            # DMA instead of materializing an extra HBM copy of x
            allow_input_fusion=[True, False, False],
        ),
        cost_estimate=cost,
    )(patches, w_mat, b_mat)

    # free reshape: (N, C_out, Do*Ho*Wo) -> NCDHW (no HBM transpose pass)
    return out_flat.reshape(N, C_out, Do, Ho, Wo)


def _reference(x, weight, bias, stride=2, compute_dtype=jnp.float32):
    y = jax.lax.conv_general_dilated(
        x.astype(compute_dtype), weight.astype(compute_dtype),
        window_strides=(stride, stride, stride),
        padding="VALID",
        dimension_numbers=("NCDHW", "OIDHW", "NCDHW"),
        preferred_element_type=jnp.float32,
    )
    y = y + bias.reshape(1, -1, 1, 1, 1).astype(jnp.float32)
    return jnp.maximum(y, 0.0).astype(x.dtype)


if __name__ == "__main__":
    key = jax.random.PRNGKey(0)
    k_x, k_w, k_b = jax.random.split(key, 3)

    # small shapes consistent with the module: N=2, C_in=4, C_out=8, D=H=W=16
    N, C_in, C_out, D, H, W, stride = 2, 4, 8, 16, 16, 16, 2

    x = jax.random.normal(k_x, (N, C_in, D, H, W), dtype=jnp.float32)
    # deterministic "kaiming-ish" init (synthetic weights, no checkpoint)
    fan_in = C_in * stride ** 3
    bound = 1.0 / (fan_in ** 0.5)
    weight = jax.random.uniform(k_w, (C_out, C_in, stride, stride, stride),
                                minval=-bound, maxval=bound, dtype=jnp.float32)
    bias = jax.random.uniform(k_b, (C_out,), minval=-bound, maxval=bound,
                              dtype=jnp.float32)

    ref_f32 = jax.block_until_ready(_reference(x, weight, bias, stride=stride))

    # exact-semantics path (matches the PyTorch module numerics: f32 in/out)
    out = jax.block_until_ready(
        downsampling_conv_block(x, weight, bias, stride=stride))
    assert out.shape == (N, C_out, D // stride, H // stride, W // stride)
    assert out.dtype == x.dtype
    assert jnp.allclose(out, ref_f32, atol=1e-5, rtol=1e-5), \
        "mismatch vs f32 reference"

    # fast path: bf16 streaming + bf16 output (f32 MXU accumulate)
    out_fast = jax.block_until_ready(
        downsampling_conv_block(x, weight, bias, stride=stride,
                                compute_dtype=jnp.bfloat16,
                                out_dtype=jnp.bfloat16))
    assert out_fast.shape == out.shape
    assert out_fast.dtype == jnp.bfloat16
    assert jnp.allclose(out_fast.astype(jnp.float32), ref_f32,
                        atol=5e-2, rtol=5e-2), \
        "bf16 fast path drifted too far from f32 reference"

    print("KERNEL_OK")
</pallas_src>

<mosaic_0001>
module attributes {stable_mosaic.version = 11 : i64} {
  func.func @_conv_matmul_relu_kernel(%arg0: i32, %arg1: i32, %arg2: memref<1x32x512xf32, #tpu.memory_space<vmem>>, %arg3: memref<8x32xf32, #tpu.memory_space<vmem>>, %arg4: memref<8x1xf32, #tpu.memory_space<vmem>>, %arg5: memref<1x8x512xf32, #tpu.memory_space<vmem>>) attributes {dimension_semantics = [#tpu.dimension_semantics<parallel>, #tpu.dimension_semantics<parallel>], iteration_bounds = array<i64: 2, 1>, scalar_prefetch = 0 : i64, scratch_operands = 0 : i64, tpu.core_type = #tpu.core_type<tc>, window_params = [{transform_indices = @transform_0, window_bounds = array<i64: 1, 32, 512>}, {pipeline_mode = #tpu.pipeline_mode<synchronous>, transform_indices = @transform_1, window_bounds = array<i64: 8, 32>}, {pipeline_mode = #tpu.pipeline_mode<synchronous>, transform_indices = @transform_2, window_bounds = array<i64: 8, 1>}, {transform_indices = @transform_3, window_bounds = array<i64: 1, 8, 512>}]} {
    %c0 = arith.constant 0 : index
    %c0_0 = arith.constant 0 : index
    %0 = vector.load %arg3[%c0, %c0_0] : memref<8x32xf32, #tpu.memory_space<vmem>>, vector<8x32xf32>
    %c0_1 = arith.constant 0 : index
    %c0_2 = arith.constant 0 : index
    %c0_3 = arith.constant 0 : index
    %1 = vector.load %arg2[%c0_1, %c0_2, %c0_3] : memref<1x32x512xf32, #tpu.memory_space<vmem>>, vector<1x32x512xf32>
    %2 = vector.shape_cast %1 : vector<1x32x512xf32> to vector<32x512xf32>
    %cst = arith.constant dense<0.000000e+00> : vector<8x512xf32>
    %3 = tpu.matmul %0, %2, %cst {dimension_numbers = #tpu.dot_dimension_numbers<[1], [0], [0], [1], [0, 0, 1, 1], [], []>} : vector<8x32xf32>, vector<32x512xf32>, vector<8x512xf32> -> vector<8x512xf32>
    %c0_4 = arith.constant 0 : index
    %c0_5 = arith.constant 0 : index
    %4 = vector.load %arg4[%c0_4, %c0_5] : memref<8x1xf32, #tpu.memory_space<vmem>>, vector<8x1xf32>
    %5 = vector.broadcast %4 : vector<8x1xf32> to vector<8x512xf32>
    %6 = arith.addf %3, %5 : vector<8x512xf32>
    %cst_6 = arith.constant 0.000000e+00 : f32
    %7 = vector.broadcast %cst_6 : f32 to vector<8x512xf32>
    %8 = arith.maximumf %6, %7 : vector<8x512xf32>
    %c0_7 = arith.constant 0 : index
    %c0_8 = arith.constant 0 : index
    %c0_9 = arith.constant 0 : index
    %9 = vector.load %arg5[%c0_7, %c0_8, %c0_9] : memref<1x8x512xf32, #tpu.memory_space<vmem>>, vector<1x8x512xf32>
    %10 = vector.shape_cast %9 : vector<1x8x512xf32> to vector<8x512xf32>
    %11 = vector.shape_cast %8 : vector<8x512xf32> to vector<1x8x512xf32>
    tpu.vector_store %arg5[%c0_7, %c0_8, %c0_9], %11 {strides = array<i32>} : memref<1x8x512xf32, #tpu.memory_space<vmem>>, vector<1x8x512xf32>,
    return
  }
  func.func @transform_0(%arg0: i32, %arg1: i32) -> (i32, i32, i32) {
    %c0_i32 = arith.constant 0 : i32
    %c0_i32_0 = arith.constant 0 : i32
    return %arg0, %c0_i32, %arg1 : i32, i32, i32
  }
  func.func @transform_1(%arg0: i32, %arg1: i32) -> (i32, i32) {
    %c0_i32 = arith.constant 0 : i32
    %c0_i32_0 = arith.constant 0 : i32
    %c0_i32_1 = arith.constant 0 : i32
    return %c0_i32, %c0_i32_0 : i32, i32
  }
  func.func @transform_2(%arg0: i32, %arg1: i32) -> (i32, i32) {
    %c0_i32 = arith.constant 0 : i32
    %c0_i32_0 = arith.constant 0 : i32
    %c0_i32_1 = arith.constant 0 : i32
    return %c0_i32, %c0_i32_0 : i32, i32
  }
  func.func @transform_3(%arg0: i32, %arg1: i32) -> (i32, i32, i32) {
    %c0_i32 = arith.constant 0 : i32
    %c0_i32_0 = arith.constant 0 : i32
    return %arg0, %c0_i32, %arg1 : i32, i32, i32
  }
}

</mosaic_0001>

<llo_original>
// kernel: tpu_custom_call.1
$region0: #{tpu_custom_call.1}
  #allocation0 [shape = 'u32[]', space=smem, size = 0x4, offset = 0x4, fixed_abs, tag = 'smem constant byte address 0x4 - core index']
  #allocation1 [shape = 'u32[72,128]{1,0:T(1,128)}', space=vmem, size = 0x9000, scoped, tag = 'internal scratch']
  %s0 = inlined_call_operand.hbm [shape: f32[2,32,512], index: 0, kind: input, shape index: {}]
  %s1 = inlined_call_operand.vmem [shape: f32[8,32], index: 1, kind: input, shape index: {}]
  %s2 = inlined_call_operand.vmem [shape: f32[8,1], index: 2, kind: input, shape index: {}]
  %s3 = inlined_call_operand.hbm [shape: f32[2,8,512], index: 3, kind: output, shape index: {}]
  %s4 = sld [smem:[#allocation0]]
  $region49: #{tpu_custom_call.1} parent=0
    _
  %s6 = ssub.s32 1, %s4
  %s7 = scalar_select 0, %s6, %s4
  $region1: #{tpu_custom_call.1} parent=0
    #allocation2 [shape = 'u8[131072]{0}', space=vmem, size = 0x20000, scoped, tag = 'input window, operand 0']
    #allocation3 [shape = 's32[2]{0}', space=sflag, size = 0x8, scoped, tag = 'scoped memory for tpu_custom_call.1']
    #allocation4 [shape = 's32[2]{0}', space=sflag, size = 0x8, scoped, tag = 'scoped memory for tpu_custom_call.1']
    #allocation5 [shape = 'u8[32768]{0}', space=vmem, size = 0x8000, scoped, tag = 'output window, operand 0']
    %8 = vsyncpa [#allocation3], 0
    %s9 = scalar_lea.sflag [#allocation3], 1
    %10 = vsyncpa %s9, 0
    %11 = vsyncpa [#allocation4], 0
    %s12 = scalar_lea.sflag [#allocation4], 1
    %13 = vsyncpa %s12, 0
    loop: start=0, step=1, limit=4
    $region2: #{tpu_custom_call.1} parent=1 // loop_pre_header
      _
    $region3: #{tpu_custom_call.1} parent=1 // loop_header
      %s15 = sphi 0, %s19
      %p16 = scmp.ge.s32.totalorder %s15, 4
      %s22 = sphi 0, %s34
      %s23 = sphi 0, %s30
      %s24 = sphi 0, %s22
      %s25 = sphi 0, %s23
      %s26 = sphi 0, %s24
      %s27 = sphi 0, %s25
      %s39 = sphi 0, %s41
      %s42 = sphi 0, %s39
      %s43 = sphi 0, %s42
      %s59 = sphi 0, %s43
      %s63 = sphi 0, %s63
      %s65 = sphi 0, %s63
      %s66 = sphi 0, %s65
      %s80 = sphi 0, %s66
      %s84 = sphi 0, %s84
      %s86 = sphi 0, %s84
      %s87 = sphi 0, %s86
      %s101 = sphi 0, %s87
      %s109 = sphi 0, %s111
      %s112 = sphi 0, %s109
      %s113 = sphi 0, %s112
      %s129 = sphi 0, %s113
    $region4: #{tpu_custom_call.1} parent=1 // loop_header_branch
      %18 = sbr.rel (%p16) target = $region8
    $region5: #{tpu_custom_call.1} parent=1 // loop_body
      %s20 = ssub.s32 %s15, 1
      %s21 = ssub.s32 %s15, 2
      %s28 = sadd.s32 1, %s23
      %p29 = scmp.ge.s32.totalorder %s28, 1
      %s30 = scalar_select %p29, 0, %s28
      %s31 = sadd.s32 1, %s22
      %s32 = scalar_select %p29, %s31, %s22
      %p33 = scmp.ge.s32.totalorder %s32, 2
      %s34 = scalar_select %p33, 0, %s32
      %s35 = ssub.s32 %s22, %s34
      %s36 = ssub.s32 %s23, %s30
      %s37 = sor.u32 %s35, %s36
      %p38 = scmp.eq.s32.totalorder %s37, 0
      %s40 = sadd.s32 %s39, 1
      %s41 = scalar_select %p38, %s39, %s40
      %p44 = pneg %p38
      %p45 = scmp.eq.s32.totalorder %s15, 1
      %p46 = por %p44, %p45
      %p47 = scmp.ne.s32.totalorder %s39, %s42
      %p48 = scmp.eq.s32.totalorder %s15, 0
      %p49 = por %p47, %p48
      %p50 = scmp.ne.s32.totalorder %s39, %s42
      %p51 = scmp.eq.s32.totalorder %s20, 1
      %p52 = por %p50, %p51
      %p53 = scmp.ne.s32.totalorder %s42, %s43
      %p54 = scmp.eq.s32.totalorder %s20, 0
      %p55 = por %p53, %p54
      %p56 = scmp.ne.s32.totalorder %s42, %s43
      %p57 = scmp.eq.s32.totalorder %s21, 1
      %p58 = por %p56, %p57
      %p60 = scmp.ne.s32.totalorder %s43, %s59
      %p61 = scmp.eq.s32.totalorder %s21, 0
      %p62 = por %p60, %p61
      %s64 = sadd.s32 %s63, 1
      %p67 = scmp.eq.s32.totalorder %s15, 1
      %p68 = scmp.ne.s32.totalorder %s63, %s65
      %p69 = scmp.eq.s32.totalorder %s15, 0
      %p70 = por %p68, %p69
      %p71 = scmp.ne.s32.totalorder %s63, %s65
      %p72 = scmp.eq.s32.totalorder %s20, 1
      %p73 = por %p71, %p72
      %p74 = scmp.ne.s32.totalorder %s65, %s66
      %p75 = scmp.eq.s32.totalorder %s20, 0
      %p76 = por %p74, %p75
      %p77 = scmp.ne.s32.totalorder %s65, %s66
      %p78 = scmp.eq.s32.totalorder %s21, 1
      %p79 = por %p77, %p78
      %p81 = scmp.ne.s32.totalorder %s66, %s80
      %p82 = scmp.eq.s32.totalorder %s21, 0
      %p83 = por %p81, %p82
      %s85 = sadd.s32 %s84, 1
      %p88 = scmp.eq.s32.totalorder %s15, 1
      %p89 = scmp.ne.s32.totalorder %s84, %s86
      %p90 = scmp.eq.s32.totalorder %s15, 0
      %p91 = por %p89, %p90
      %p92 = scmp.ne.s32.totalorder %s84, %s86
      %p93 = scmp.eq.s32.totalorder %s20, 1
      %p94 = por %p92, %p93
      %p95 = scmp.ne.s32.totalorder %s86, %s87
      %p96 = scmp.eq.s32.totalorder %s20, 0
      %p97 = por %p95, %p96
      %p98 = scmp.ne.s32.totalorder %s86, %s87
      %p99 = scmp.eq.s32.totalorder %s21, 1
      %p100 = por %p98, %p99
      %p102 = scmp.ne.s32.totalorder %s87, %s101
      %p103 = scmp.eq.s32.totalorder %s21, 0
      %p104 = por %p102, %p103
      %s105 = ssub.s32 %s22, %s34
      %s106 = ssub.s32 %s23, %s30
      %s107 = sor.u32 %s105, %s106
      %p108 = scmp.eq.s32.totalorder %s107, 0
      %s110 = sadd.s32 %s109, 1
      %s111 = scalar_select %p108, %s109, %s110
      %p114 = pneg %p108
      %p115 = scmp.eq.s32.totalorder %s15, 1
      %p116 = por %p114, %p115
      %p117 = scmp.ne.s32.totalorder %s109, %s112
      %p118 = scmp.eq.s32.totalorder %s15, 0
      %p119 = por %p117, %p118
      %p120 = scmp.ne.s32.totalorder %s109, %s112
      %p121 = scmp.eq.s32.totalorder %s20, 1
      %p122 = por %p120, %p121
      %p123 = scmp.ne.s32.totalorder %s112, %s113
      %p124 = scmp.eq.s32.totalorder %s20, 0
      %p125 = por %p123, %p124
      %p126 = scmp.ne.s32.totalorder %s112, %s113
      %p127 = scmp.eq.s32.totalorder %s21, 1
      %p128 = por %p126, %p127
      %p130 = scmp.ne.s32.totalorder %s113, %s129
      %p131 = scmp.eq.s32.totalorder %s21, 0
      %p132 = por %p130, %p131
      %p133 = scmp.le.s32.totalorder 1, %s15
      %p134 = scmp.lt.s32.totalorder %s15, 3
      %p135 = pnand %p133, %p134
      %p136 = pneg %p135
      // Predicated region
      $region9: #{tpu_custom_call.1} parent=5 // pred_check
        _
      $region10: #{tpu_custom_call.1} parent=5 // pred_check_branch
        %138 = sbr.rel (%p135) target = $region12
      $region11: #{tpu_custom_call.1} parent=5 // pred_region
        %s139 = ssub.s32 %s15, 1
        // Predicated region
        $region13: #{tpu_custom_call.1} parent=11 // pred_check
          %p140 = pneg %p76
        $region14: #{tpu_custom_call.1} parent=11 // pred_check_branch
          %142 = sbr.rel (%p140) target = $region16
        $region15: #{tpu_custom_call.1} parent=11 // pred_region
          _
        $region16: #{tpu_custom_call.1} parent=11 // pred_fallthru
          _
        // Predicated region
        $region17: #{tpu_custom_call.1} parent=11 // pred_check
          %p143 = pneg %p97
        $region18: #{tpu_custom_call.1} parent=11 // pred_check_branch
          %145 = sbr.rel (%p143) target = $region20
        $region19: #{tpu_custom_call.1} parent=11 // pred_region
          _
        $region20: #{tpu_custom_call.1} parent=11 // pred_fallthru
          _
      $region12: #{tpu_custom_call.1} parent=5 // pred_fallthru
        _
      %p146 = scmp.lt.s32.totalorder %s15, 2
      // Predicated region
      $region21: #{tpu_custom_call.1} parent=5 // pred_check
        %p147 = pneg %p146
      $region22: #{tpu_custom_call.1} parent=5 // pred_check_branch
        %149 = sbr.rel (%p147) target = $region24
      $region23: #{tpu_custom_call.1} parent=5 // pred_region
        // Predicated region
        $region25: #{tpu_custom_call.1} parent=23 // pred_check
          %p150 = pneg %p49
        $region26: #{tpu_custom_call.1} parent=23 // pred_check_branch
          %152 = sbr.rel (%p150) target = $region28
        $region27: #{tpu_custom_call.1} parent=23 // pred_region
          %s153 = sand.u32 %s39, 1
          %s154 = scalar_lea.sflag [#allocation3], %s153
          %s155 = sand.u32 %s39, 1
          %s156 = smul.addr %s155, 128
          %s157 = scalar_lea.vmem [#allocation2], %s156
          %s158 = smul.u32 4, %s23
          %160 = vsyncadd %s154, 0
          %s161 = smul.addr %s22, 16
          %s162 = sadd.s32 %s158, %s161
          %s163 = smul.addr %s162, 8
          %s164 = scalar_lea.hbm %s0, %s163
          %s165 = sshll.u32 %s164, 4
          %s166 = int_to_ptr.hbm [resolvable:$true] %s165
          %s167 = sshll.u32 %s157, 4
          %s168 = int_to_ptr.vmem [resolvable:$true] %s167
          %173 = dma.hbm_to_vmem [thread:$0]  %s166, 2048, %s168, %s154, 512, 512, 32
        $region28: #{tpu_custom_call.1} parent=23 // pred_fallthru
          _
      $region24: #{tpu_custom_call.1} parent=5 // pred_fallthru
        _
      %p174 = scmp.le.s32.totalorder 1, %s15
      %p175 = scmp.lt.s32.totalorder %s15, 3
      %p176 = pnand %p174, %p175
      %p177 = pneg %p176
      // Predicated region
      $region29: #{tpu_custom_call.1} parent=5 // pred_check
        _
      $region30: #{tpu_custom_call.1} parent=5 // pred_check_branch
        %179 = sbr.rel (%p176) target = $region32
      $region31: #{tpu_custom_call.1} parent=5 // pred_region
        %s180 = ssub.s32 %s15, 1
        %s181 = sand.u32 %s42, 1
        %s182 = scalar_lea.sflag [#allocation3], %s181
        %s183 = sand.u32 %s42, 1
        %s184 = smul.addr %s183, 128
        %s185 = scalar_lea.vmem [#allocation2], %s184
        // Predicated region
        $region33: #{tpu_custom_call.1} parent=31 // pred_check
          %p186 = pneg %p55
        $region34: #{tpu_custom_call.1} parent=31 // pred_check_branch
          %188 = sbr.rel (%p186) target = $region36
        $region35: #{tpu_custom_call.1} parent=31 // pred_region
          %190 = dma.done %s182, 2048
        $region36: #{tpu_custom_call.1} parent=31 // pred_fallthru
          _
        %s191 = sand.u32 %s42, 1
        %s192 = scalar_lea.sflag [#allocation3], %s191
        %s193 = sand.u32 %s42, 1
        %s194 = smul.addr %s193, 128
        %s195 = scalar_lea.vmem [#allocation2], %s194
        %p196 = pneg %p55
        %p197 = pneg %p52
        %p198 = pneg %p76
        %p199 = pneg %p73
        %p200 = pneg %p97
        %p201 = pneg %p94
        %p202 = pneg %p125
        %p203 = pneg %p122
        %s204 = sand.u32 %s112, 1
        %s205 = scalar_lea.sflag [#allocation4], %s204
        %s206 = sand.u32 %s112, 1
        %s207 = smul.addr %s206, 32
        %s208 = scalar_lea.vmem [#allocation5], %s207
        %s209 = smul.u32 4, %s25
        %s210 = smul.u32 4, %s25
        %v211 = vld [vmem:[%s1] sm:$0xff]
        %v212 = vld [vmem:[%s185] sm:$0xff]
        %v213 = vld [vmem:[%s185 + $0x8] sm:$0xff]
        %v214 = vld [vmem:[%s185 + $0x10] sm:$0xff]
        %v215 = vld [vmem:[%s185 + $0x18] sm:$0xff]
        %v216 = vld [vmem:[%s185 + $0x20] sm:$0xff]
        %v217 = vld [vmem:[%s185 + $0x28] sm:$0xff]
        %v218 = vld [vmem:[%s185 + $0x30] sm:$0xff]
        %v219 = vld [vmem:[%s185 + $0x38] sm:$0xff]
        %v220 = vld [vmem:[%s185 + $0x40] sm:$0xff]
        %v221 = vld [vmem:[%s185 + $0x48] sm:$0xff]
        %v222 = vld [vmem:[%s185 + $0x50] sm:$0xff]
        %v223 = vld [vmem:[%s185 + $0x58] sm:$0xff]
        %v224 = vld [vmem:[%s185 + $0x60] sm:$0xff]
        %v225 = vld [vmem:[%s185 + $0x68] sm:$0xff]
        %v226 = vld [vmem:[%s185 + $0x70] sm:$0xff]
        %v227 = vld [vmem:[%s185 + $0x78] sm:$0xff]
        %v228 = vld [vmem:[%s2] sm:$0xff]
        %230 = vset.pattern.permute.xlu0 0
        %231 = vperm.xlu0 %230, %v228
        %v232 = vpop.permute.xlu0 %231
        %vm234 = vcmask 261120
        %v236 = vsel %vm234, %v211, 0
        %238 = vmatpush.msra.mxu0 0.0
        %239 = vmatpush.msra.mxu0 0.0
        %240 = vmatpush.msra.mxu0 0.0
        %241 = vmatpush.msra.mxu0 0.0
        %242 = vmatpush.msra.mxu0 0.0
        %243 = vmatpush.msra.mxu0 0.0
        %244 = vmatpush.msra.mxu0 0.0
        %245 = vmatpush.msra.mxu0 0.0
        %246 = vmatpush.msra.mxu0 0.0
        %247 = vmatpush.msra.mxu0 0.0
        %248 = vmatpush.msra.mxu0 0.0
        %249 = vmatpush.msra.mxu0 0.0
        %250 = vmatpush.msra.mxu0 %v224
        %251 = vmatpush.msra.mxu0 %v220
        %252 = vmatpush.msra.mxu0 %v216
        %253 = vmatpush.msra.mxu0 %v212
        %254 = vmatmul.f32.gmra.mxu0 %v236
        %v255 = vpop.f32.mrf.mxu0
        %v256 = vadd.f32 %v232, %v255
        %257 = vdwg.mxu0
        %258 = vmatpush.msra.mxu0 0.0
        %259 = vmatpush.msra.mxu0 0.0
        %260 = vmatpush.msra.mxu0 0.0
        %261 = vmatpush.msra.mxu0 0.0
        %262 = vmatpush.msra.mxu0 0.0
        %263 = vmatpush.msra.mxu0 0.0
        %264 = vmatpush.msra.mxu0 0.0
        %265 = vmatpush.msra.mxu0 0.0
        %266 = vmatpush.msra.mxu0 0.0
        %267 = vmatpush.msra.mxu0 0.0
        %268 = vmatpush.msra.mxu0 0.0
        %269 = vmatpush.msra.mxu0 0.0
        %270 = vmatpush.msra.mxu0 %v225
        %271 = vmatpush.msra.mxu0 %v221
        %272 = vmatpush.msra.mxu0 %v217
        %273 = vmatpush.msra.mxu0 %v213
        %274 = vmatmul.f32.gmra.mxu0 %v236
        %v275 = vpop.f32.mrf.mxu0
        %v276 = vadd.f32 %v232, %v275
        %277 = vdwg.mxu0
        %278 = vmatpush.msra.mxu0 0.0
        %279 = vmatpush.msra.mxu0 0.0
        %280 = vmatpush.msra.mxu0 0.0
        %281 = vmatpush.msra.mxu0 0.0
        %282 = vmatpush.msra.mxu0 0.0
        %283 = vmatpush.msra.mxu0 0.0
        %284 = vmatpush.msra.mxu0 0.0
        %285 = vmatpush.msra.mxu0 0.0
        %286 = vmatpush.msra.mxu0 0.0
        %287 = vmatpush.msra.mxu0 0.0
        %288 = vmatpush.msra.mxu0 0.0
        %289 = vmatpush.msra.mxu0 0.0
        %290 = vmatpush.msra.mxu0 %v226
        %291 = vmatpush.msra.mxu0 %v222
        %292 = vmatpush.msra.mxu0 %v218
        %293 = vmatpush.msra.mxu0 %v214
        %294 = vmatmul.f32.gmra.mxu0 %v236
        %v295 = vpop.f32.mrf.mxu0
        %v296 = vadd.f32 %v232, %v295
        %297 = vdwg.mxu0
        %298 = vmatpush.msra.mxu0 0.0
        %299 = vmatpush.msra.mxu0 0.0
        %300 = vmatpush.msra.mxu0 0.0
        %301 = vmatpush.msra.mxu0 0.0
        %302 = vmatpush.msra.mxu0 0.0
        %303 = vmatpush.msra.mxu0 0.0
        %304 = vmatpush.msra.mxu0 0.0
        %305 = vmatpush.msra.mxu0 0.0
        %306 = vmatpush.msra.mxu0 0.0
        %307 = vmatpush.msra.mxu0 0.0
        %308 = vmatpush.msra.mxu0 0.0
        %309 = vmatpush.msra.mxu0 0.0
        %310 = vmatpush.msra.mxu0 %v227
        %311 = vmatpush.msra.mxu0 %v223
        %312 = vmatpush.msra.mxu0 %v219
        %313 = vmatpush.msra.mxu0 %v215
        %314 = vmatmul.f32.gmra.mxu0 %v236
        %v315 = vpop.f32.mrf.mxu0
        %v316 = vadd.f32 %v232, %v315
        %317 = vdwg.mxu0
        %v318 = vmax.f32 %v256, 0.0
        %v319 = vmax.f32 %v276, 0.0
        %v320 = vmax.f32 %v296, 0.0
        %v321 = vmax.f32 %v316, 0.0
        %322 = vst [vmem:[%s208] sm:$0xff] %v318
        %323 = vst [vmem:[%s208 + $0x8] sm:$0xff] %v319
        %324 = vst [vmem:[%s208 + $0x10] sm:$0xff] %v320
        %325 = vst [vmem:[%s208 + $0x18] sm:$0xff] %v321
        %s326 = sand.u32 %s112, 1
        %s327 = scalar_lea.sflag [#allocation4], %s326
        %s328 = sand.u32 %s112, 1
        %s329 = smul.addr %s328, 32
        %s330 = scalar_lea.vmem [#allocation5], %s329
        // Predicated region
        $region37: #{tpu_custom_call.1} parent=31 // pred_check
          %p331 = pneg %p122
        $region38: #{tpu_custom_call.1} parent=31 // pred_check_branch
          %333 = sbr.rel (%p331) target = $region40
        $region39: #{tpu_custom_call.1} parent=31 // pred_region
          %s334 = smul.u32 4, %s25
          %336 = vsyncadd %s327, 0
          %s337 = smul.addr %s24, 4
          %s338 = sadd.s32 %s334, %s337
          %s339 = smul.addr %s338, 8
          %s340 = scalar_lea.hbm %s3, %s339
          %s342 = sshll.u32 %s330, 4
          %s343 = int_to_ptr.vmem [resolvable:$true] %s342
          %s344 = sshll.u32 %s340, 4
          %s345 = int_to_ptr.hbm [resolvable:$true] %s344
          %347 = dma.vmem_to_hbm [thread:$0]  %s343, 512, %s345, %s327
        $region40: #{tpu_custom_call.1} parent=31 // pred_fallthru
          _
      $region32: #{tpu_custom_call.1} parent=5 // pred_fallthru
        _
      %p348 = scmp.le.s32.totalorder 2, %s15
      // Predicated region
      $region41: #{tpu_custom_call.1} parent=5 // pred_check
        %p349 = pneg %p348
      $region42: #{tpu_custom_call.1} parent=5 // pred_check_branch
        %351 = sbr.rel (%p349) target = $region44
      $region43: #{tpu_custom_call.1} parent=5 // pred_region
        %s352 = ssub.s32 %s15, 2
        // Predicated region
        $region45: #{tpu_custom_call.1} parent=43 // pred_check
          %p353 = pneg %p128
        $region46: #{tpu_custom_call.1} parent=43 // pred_check_branch
          %355 = sbr.rel (%p353) target = $region48
        $region47: #{tpu_custom_call.1} parent=43 // pred_region
          %s356 = sand.u32 %s113, 1
          %s357 = scalar_lea.sflag [#allocation4], %s356
          %s358 = sand.u32 %s113, 1
          %s359 = smul.addr %s358, 32
          %s360 = scalar_lea.vmem [#allocation5], %s359
          %362 = dma.done %s357, 512
        $region48: #{tpu_custom_call.1} parent=43 // pred_fallthru
          _
      $region44: #{tpu_custom_call.1} parent=5 // pred_fallthru
        _
    $region6: #{tpu_custom_call.1} parent=1 // loop_footer
      %s19 = sadd.s32 1, %s15
    $region7: #{tpu_custom_call.1} parent=1 // loop_footer_branch
      %14 = sbr.rel target = $region3
    $region8: #{tpu_custom_call.1} parent=1 // loop_exit
      _
    %363 = vsyncpa [#allocation3], 1
    %s364 = scalar_lea.sflag [#allocation3], 1
    %365 = vsyncpa %s364, 1
    %366 = vsyncpa [#allocation4], 1
    %s367 = scalar_lea.sflag [#allocation4], 1
    %368 = vsyncpa %s367, 1

</llo_original>
